<compile_context>
chip_gen: v7x
topology: tpu7x:2x2x1
jax: 0.10.0
libtpu: 0.0.40
codegen_flags: <defaults>
</compile_context>

<pallas_src>
import jax
import jax.numpy as jnp
from jax.experimental import pallas as pl
from jax.experimental.pallas import tpu as pltpu

D_IN = 768 * 2          # 1536 input features (fixed by the module)
MAX_TB = 2048           # max batch rows per tile (bf16 tile = 6 MiB)
SMALL_BATCH = 1024      # below this, plain XLA GEMV+sigmoid is as fast


def _round_up(n, m):
    return ((n + m - 1) // m) * m


def _choose_tb(B, mult):
    # Big tiles amortize the ~0.35us/step overhead, but keep >= 2 grid steps
    # when possible so both TensorCores on v7x get work.
    if B <= mult:
        return _round_up(B, mult)
    target = _round_up(max(pl.cdiv(B, 2), mult), mult)
    return min(MAX_TB, target)


def fluency_kernel(x_ref, w_ref, b_ref, o_ref):
    # x_ref: (TB, D_IN) bf16 VMEM   w_ref: (D_IN, 1) bf16 VMEM
    # b_ref: (1,) f32 SMEM          o_ref: (TB, 1) f32 VMEM
    # Natural MXU form (LHS last dim vs RHS second-to-last): no x transpose.
    z = jnp.dot(x_ref[...], w_ref[...], preferred_element_type=jnp.float32)
    o_ref[...] = jax.nn.sigmoid(z + b_ref[0])       # EUP exp/recip, f32


@jax.jit
def fluency_forward_pallas(x, w, b):
    B, D = x.shape
    assert D == D_IN
    # Stream x in bf16 (cast is a no-op if it already arrives in bf16).
    x_bf = x if x.dtype == jnp.bfloat16 else x.astype(jnp.bfloat16)
    w_col = w.reshape(D_IN, 1).astype(jnp.bfloat16)   # tiny; bf16 to match MXU
    b_vec = b.reshape(-1).astype(jnp.float32)         # (1,) scalar bias in SMEM

    mult = 16 if x_bf.dtype == jnp.bfloat16 else 8    # sublane multiple
    tb = _choose_tb(B, mult)
    n_tiles = pl.cdiv(B, tb)

    cost = pl.CostEstimate(
        flops=2 * B * D_IN,
        transcendentals=B,
        bytes_accessed=B * D_IN * x_bf.dtype.itemsize + D_IN * 2 + 4 + B * 4,
    )

    out = pl.pallas_call(
        fluency_kernel,
        out_shape=jax.ShapeDtypeStruct((B, 1), jnp.float32),
        grid_spec=pltpu.PrefetchScalarGridSpec(
            num_scalar_prefetch=0,
            grid=(n_tiles,),
            in_specs=[
                pl.BlockSpec((tb, D_IN), lambda i: (i, 0)),       # x tile (streamed)
                pl.BlockSpec((D_IN, 1), lambda i: (0, 0)),        # weight col (invariant)
                pl.BlockSpec(memory_space=pltpu.MemorySpace.SMEM),  # bias scalar
            ],
            # (tb,1) block on (B,1): last dim equals array dim, tb is 8-divisible,
            # so this is legal for any n_tiles; tail tiles are partial blocks.
            out_specs=pl.BlockSpec((tb, 1), lambda i: (i, 0)),
        ),
        compiler_params=pltpu.CompilerParams(
            dimension_semantics=("parallel",),   # shards the batch grid across TCs
            vmem_limit_bytes=48 * 1024 * 1024,   # 2x6 MiB x-bufs + out/weight + slack
        ),
        cost_estimate=cost,
    )(x_bf, w_col, b_vec)
    return out


def fluency_forward(x, w, b):
    # Dispatcher: tiny batches are launch-overhead bound -> plain fused XLA.
    B = x.shape[0]
    if B < SMALL_BATCH:
        z = x.astype(jnp.float32) @ w.reshape(D_IN, 1).astype(jnp.float32)
        return jax.nn.sigmoid(z + b.reshape(1, 1).astype(jnp.float32))
    return fluency_forward_pallas(x, w, b)


if __name__ == "__main__":
    key = jax.random.PRNGKey(0)
    kx, kw, kb = jax.random.split(key, 3)

    B = 16  # small batch; feature dim fixed by the module (768 * 2)
    x_f32 = jax.random.normal(kx, (B, D_IN), dtype=jnp.float32)

    # Deterministic params, mimicking nn.Linear's U(-1/sqrt(fan_in), +1/sqrt(fan_in)).
    bound = 1.0 / jnp.sqrt(jnp.float32(D_IN))
    w = jax.random.uniform(kw, (D_IN, 1), jnp.float32, -bound, bound)
    b = jax.random.uniform(kb, (1,), jnp.float32, -bound, bound)

    # Hand the kernel bf16 activations (as upstream code would in production).
    x_bf16 = x_f32.astype(jnp.bfloat16)
    out = fluency_forward_pallas(x_bf16, w, b)
    jax.block_until_ready(out)

    assert out.shape == (B, 1)
    # Reference with the same bf16 rounding of x/w, f32 accumulate (tight check).
    x_r = x_bf16.astype(jnp.float32)
    w_r = w.astype(jnp.bfloat16).astype(jnp.float32)
    ref = jax.nn.sigmoid(x_r @ w_r + b)
    assert jnp.allclose(out, ref, atol=1e-4, rtol=1e-4)
    # Loose check against the full-precision module output.
    ref_f32 = jax.nn.sigmoid(x_f32 @ w + b)
    assert jnp.allclose(out, ref_f32, atol=1e-2)

    print("KERNEL_OK")
</pallas_src>

<mosaic_0001>
module attributes {stable_mosaic.version = 11 : i64} {
  func.func @fluency_kernel(%arg0: i32, %arg1: memref<16x1536xbf16, #tpu.memory_space<vmem>>, %arg2: memref<1536x1xbf16, #tpu.memory_space<vmem>>, %arg3: memref<1xf32, #tpu.memory_space<smem>>, %arg4: memref<16x1xf32, #tpu.memory_space<vmem>>) attributes {dimension_semantics = [#tpu.dimension_semantics<parallel>], iteration_bounds = array<i64: 1>, scalar_prefetch = 0 : i64, scratch_operands = 0 : i64, tpu.core_type = #tpu.core_type<tc>, window_params = [{transform_indices = @transform_0, window_bounds = array<i64: 16, 1536>}, {pipeline_mode = #tpu.pipeline_mode<synchronous>, transform_indices = @transform_1, window_bounds = array<i64: 1536, 1>}, {transform_indices = @transform_2, window_bounds = array<i64: 1>}, {transform_indices = @transform_3, window_bounds = array<i64: 16, 1>}]} {
    %c0 = arith.constant 0 : index
    %c0_0 = arith.constant 0 : index
    %0 = vector.load %arg1[%c0, %c0_0] : memref<16x1536xbf16, #tpu.memory_space<vmem>>, vector<16x1536xbf16>
    %c0_1 = arith.constant 0 : index
    %c0_2 = arith.constant 0 : index
    %1 = vector.load %arg2[%c0_1, %c0_2] : memref<1536x1xbf16, #tpu.memory_space<vmem>>, vector<1536x1xbf16>
    %cst = arith.constant dense<0.000000e+00> : vector<16x1xf32>
    %2 = tpu.matmul %0, %1, %cst {dimension_numbers = #tpu.dot_dimension_numbers<[1], [0], [0], [1], [0, 0, 1, 1], [], []>} : vector<16x1536xbf16>, vector<1536x1xbf16>, vector<16x1xf32> -> vector<16x1xf32>
    %c0_3 = arith.constant 0 : index
    %3 = memref.load %arg3[%c0_3] : memref<1xf32, #tpu.memory_space<smem>>
    %4 = vector.broadcast %3 : f32 to vector<16x1xf32>
    %5 = arith.addf %2, %4 : vector<16x1xf32>
    %6 = arith.negf %5 : vector<16x1xf32>
    %7 = math.exp %6 : vector<16x1xf32>
    %cst_4 = arith.constant 1.000000e+00 : f32
    %8 = vector.broadcast %cst_4 : f32 to vector<16x1xf32>
    %9 = arith.addf %8, %7 : vector<16x1xf32>
    %10 = arith.divf %8, %9 : vector<16x1xf32>
    %c0_5 = arith.constant 0 : index
    %c0_6 = arith.constant 0 : index
    %11 = vector.load %arg4[%c0_5, %c0_6] : memref<16x1xf32, #tpu.memory_space<vmem>>, vector<16x1xf32>
    tpu.vector_store %arg4[%c0_5, %c0_6], %10 {strides = array<i32>} : memref<16x1xf32, #tpu.memory_space<vmem>>, vector<16x1xf32>,
    return
  }
  func.func @transform_0(%arg0: i32) -> (i32, i32) {
    %c0_i32 = arith.constant 0 : i32
    %c0_i32_0 = arith.constant 0 : i32
    return %arg0, %c0_i32 : i32, i32
  }
  func.func @transform_1(%arg0: i32) -> (i32, i32) {
    %c0_i32 = arith.constant 0 : i32
    %c0_i32_0 = arith.constant 0 : i32
    %c0_i32_1 = arith.constant 0 : i32
    return %c0_i32, %c0_i32_0 : i32, i32
  }
  func.func @transform_2(%arg0: i32) -> i32 {
    %c0_i32 = arith.constant 0 : i32
    %c0_i32_0 = arith.constant 0 : i32
    return %c0_i32 : i32
  }
  func.func @transform_3(%arg0: i32) -> (i32, i32) {
    %c0_i32 = arith.constant 0 : i32
    %c0_i32_0 = arith.constant 0 : i32
    return %arg0, %c0_i32 : i32, i32
  }
}

</mosaic_0001>

<llo_original>
// kernel: fluency_forward_pallas.1
$region0: #{fluency_forward_pallas.1}
  #allocation0 [shape = 'u32[]', space=smem, size = 0x4, offset = 0x4, fixed_abs, tag = 'smem constant byte address 0x4 - core index']
  #allocation1 [shape = 'u32[144,128]{1,0:T(1,128)}', space=vmem, size = 0x12000, scoped, tag = 'internal scratch']
  #allocation2 [shape = 'f32[1]{0:T(128)S(6)}', space=smem, size = 0x200, scoped, tag = 'scoped memory for fluency_forward_pallas.1']
  %s0 = inlined_call_operand.vmem [shape: bf16[16,1536], index: 0, kind: input, shape index: {}]
  %s1 = inlined_call_operand.vmem [shape: bf16[1536,1], index: 1, kind: input, shape index: {}]
  %s2 = inlined_call_operand.<no memory space> [shape: f32[1], index: 2, kind: input, shape index: {}]
  %s3 = inlined_call_operand.vmem [shape: f32[16,1], index: 3, kind: output, shape index: {}]
  %s4 = sld [smem:[#allocation0]]
  $region22: #{fluency_forward_pallas.1} parent=0
    _
  %s6 = ssub.s32 1, %s4
  %s7 = scalar_select 0, %s6, %s4
  %8 = sst [smem:[#allocation2]] %s2
  // Predicated region
  $region2: #{fluency_forward_pallas.1} parent=0 // pred_check
    _
  $region3: #{fluency_forward_pallas.1} parent=0 // pred_check_branch
    %10 = sbr.rel (0) target = $region5
  $region4: #{fluency_forward_pallas.1} parent=0 // pred_region
    _
  $region5: #{fluency_forward_pallas.1} parent=0 // pred_fallthru
    _
  // Predicated region
  $region6: #{fluency_forward_pallas.1} parent=0 // pred_check
    _
  $region7: #{fluency_forward_pallas.1} parent=0 // pred_check_branch
    %12 = sbr.rel (0) target = $region9
  $region8: #{fluency_forward_pallas.1} parent=0 // pred_region
    _
  $region9: #{fluency_forward_pallas.1} parent=0 // pred_fallthru
    _
  // Predicated region
  $region10: #{fluency_forward_pallas.1} parent=0 // pred_check
    _
  $region11: #{fluency_forward_pallas.1} parent=0 // pred_check_branch
    %14 = sbr.rel (0) target = $region13
  $region12: #{fluency_forward_pallas.1} parent=0 // pred_region
    _
  $region13: #{fluency_forward_pallas.1} parent=0 // pred_fallthru
    _
  %v16 = vld [vmem:[%s0] sm:$0xff]
  %v17 = vld [vmem:[%s0 + $0x8] sm:$0xff]
  %v18 = vld [vmem:[%s0 + $0x10] sm:$0xff]
  %v19 = vld [vmem:[%s0 + $0x18] sm:$0xff]
  %v20 = vld [vmem:[%s0 + $0x20] sm:$0xff]
  %v21 = vld [vmem:[%s0 + $0x28] sm:$0xff]
  %v22 = vld [vmem:[%s0 + $0x30] sm:$0xff]
  %v23 = vld [vmem:[%s0 + $0x38] sm:$0xff]
  %v24 = vld [vmem:[%s0 + $0x40] sm:$0xff]
  %v25 = vld [vmem:[%s0 + $0x48] sm:$0xff]
  %v26 = vld [vmem:[%s0 + $0x50] sm:$0xff]
  %v27 = vld [vmem:[%s0 + $0x58] sm:$0xff]
  %v28 = vld [vmem:[%s1] sm:$0xf]
  %v29 = vld [vmem:[%s1 + $0x4] sm:$0xf]
  %v30 = vld [vmem:[%s1 + $0x8] sm:$0xf]
  %v31 = vld [vmem:[%s1 + $0xc] sm:$0xf]
  %v32 = vld [vmem:[%s1 + $0x10] sm:$0xf]
  %v33 = vld [vmem:[%s1 + $0x14] sm:$0xf]
  %v34 = vld [vmem:[%s1 + $0x18] sm:$0xf]
  %v35 = vld [vmem:[%s1 + $0x1c] sm:$0xf]
  %v36 = vld [vmem:[%s1 + $0x20] sm:$0xf]
  %v37 = vld [vmem:[%s1 + $0x24] sm:$0xf]
  %v38 = vld [vmem:[%s1 + $0x28] sm:$0xf]
  %v39 = vld [vmem:[%s1 + $0x2c] sm:$0xf]
  %v40 = vld [vmem:[%s1 + $0x30] sm:$0xf]
  %v41 = vld [vmem:[%s1 + $0x34] sm:$0xf]
  %v42 = vld [vmem:[%s1 + $0x38] sm:$0xf]
  %v43 = vld [vmem:[%s1 + $0x3c] sm:$0xf]
  %v44 = vld [vmem:[%s1 + $0x40] sm:$0xf]
  %v45 = vld [vmem:[%s1 + $0x44] sm:$0xf]
  %v46 = vld [vmem:[%s1 + $0x48] sm:$0xf]
  %v47 = vld [vmem:[%s1 + $0x4c] sm:$0xf]
  %v48 = vld [vmem:[%s1 + $0x50] sm:$0xf]
  %v49 = vld [vmem:[%s1 + $0x54] sm:$0xf]
  %v50 = vld [vmem:[%s1 + $0x58] sm:$0xf]
  %v51 = vld [vmem:[%s1 + $0x5c] sm:$0xf]
  %v52 = vld [vmem:[%s1 + $0x60] sm:$0xf]
  %v53 = vld [vmem:[%s1 + $0x64] sm:$0xf]
  %v54 = vld [vmem:[%s1 + $0x68] sm:$0xf]
  %v55 = vld [vmem:[%s1 + $0x6c] sm:$0xf]
  %v56 = vld [vmem:[%s1 + $0x70] sm:$0xf]
  %v57 = vld [vmem:[%s1 + $0x74] sm:$0xf]
  %v58 = vld [vmem:[%s1 + $0x78] sm:$0xf]
  %v59 = vld [vmem:[%s1 + $0x7c] sm:$0xf]
  %v60 = vld [vmem:[%s1 + $0x80] sm:$0xf]
  %v61 = vld [vmem:[%s1 + $0x84] sm:$0xf]
  %v62 = vld [vmem:[%s1 + $0x88] sm:$0xf]
  %v63 = vld [vmem:[%s1 + $0x8c] sm:$0xf]
  %v64 = vld [vmem:[%s1 + $0x90] sm:$0xf]
  %v65 = vld [vmem:[%s1 + $0x94] sm:$0xf]
  %v66 = vld [vmem:[%s1 + $0x98] sm:$0xf]
  %v67 = vld [vmem:[%s1 + $0x9c] sm:$0xf]
  %v68 = vld [vmem:[%s1 + $0xa0] sm:$0xf]
  %v69 = vld [vmem:[%s1 + $0xa4] sm:$0xf]
  %v70 = vld [vmem:[%s1 + $0xa8] sm:$0xf]
  %v71 = vld [vmem:[%s1 + $0xac] sm:$0xf]
  %v72 = vld [vmem:[%s1 + $0xb0] sm:$0xf]
  %v73 = vld [vmem:[%s1 + $0xb4] sm:$0xf]
  %v74 = vld [vmem:[%s1 + $0xb8] sm:$0xf]
  %v75 = vld [vmem:[%s1 + $0xbc] sm:$0xf]
  %v76 = vld [vmem:[%s1 + $0xc0] sm:$0xf]
  %v77 = vld [vmem:[%s1 + $0xc4] sm:$0xf]
  %v78 = vld [vmem:[%s1 + $0xc8] sm:$0xf]
  %v79 = vld [vmem:[%s1 + $0xcc] sm:$0xf]
  %v80 = vld [vmem:[%s1 + $0xd0] sm:$0xf]
  %v81 = vld [vmem:[%s1 + $0xd4] sm:$0xf]
  %v82 = vld [vmem:[%s1 + $0xd8] sm:$0xf]
  %v83 = vld [vmem:[%s1 + $0xdc] sm:$0xf]
  %v84 = vld [vmem:[%s1 + $0xe0] sm:$0xf]
  %v85 = vld [vmem:[%s1 + $0xe4] sm:$0xf]
  %v86 = vld [vmem:[%s1 + $0xe8] sm:$0xf]
  %v87 = vld [vmem:[%s1 + $0xec] sm:$0xf]
  %v88 = vld [vmem:[%s1 + $0xf0] sm:$0xf]
  %v89 = vld [vmem:[%s1 + $0xf4] sm:$0xf]
  %v90 = vld [vmem:[%s1 + $0xf8] sm:$0xf]
  %v91 = vld [vmem:[%s1 + $0xfc] sm:$0xf]
  %v92 = vld [vmem:[%s1 + $0x100] sm:$0xf]
  %v93 = vld [vmem:[%s1 + $0x104] sm:$0xf]
  %v94 = vld [vmem:[%s1 + $0x108] sm:$0xf]
  %v95 = vld [vmem:[%s1 + $0x10c] sm:$0xf]
  %v96 = vld [vmem:[%s1 + $0x110] sm:$0xf]
  %v97 = vld [vmem:[%s1 + $0x114] sm:$0xf]
  %v98 = vld [vmem:[%s1 + $0x118] sm:$0xf]
  %v99 = vld [vmem:[%s1 + $0x11c] sm:$0xf]
  %v100 = vld [vmem:[%s1 + $0x120] sm:$0xf]
  %v101 = vld [vmem:[%s1 + $0x124] sm:$0xf]
  %v102 = vld [vmem:[%s1 + $0x128] sm:$0xf]
  %v103 = vld [vmem:[%s1 + $0x12c] sm:$0xf]
  %v104 = vld [vmem:[%s1 + $0x130] sm:$0xf]
  %v105 = vld [vmem:[%s1 + $0x134] sm:$0xf]
  %v106 = vld [vmem:[%s1 + $0x138] sm:$0xf]
  %v107 = vld [vmem:[%s1 + $0x13c] sm:$0xf]
  %v108 = vld [vmem:[%s1 + $0x140] sm:$0xf]
  %v109 = vld [vmem:[%s1 + $0x144] sm:$0xf]
  %v110 = vld [vmem:[%s1 + $0x148] sm:$0xf]
  %v111 = vld [vmem:[%s1 + $0x14c] sm:$0xf]
  %v112 = vld [vmem:[%s1 + $0x150] sm:$0xf]
  %v113 = vld [vmem:[%s1 + $0x154] sm:$0xf]
  %v114 = vld [vmem:[%s1 + $0x158] sm:$0xf]
  %v115 = vld [vmem:[%s1 + $0x15c] sm:$0xf]
  %v116 = vld [vmem:[%s1 + $0x160] sm:$0xf]
  %v117 = vld [vmem:[%s1 + $0x164] sm:$0xf]
  %v118 = vld [vmem:[%s1 + $0x168] sm:$0xf]
  %v119 = vld [vmem:[%s1 + $0x16c] sm:$0xf]
  %v120 = vld [vmem:[%s1 + $0x170] sm:$0xf]
  %v121 = vld [vmem:[%s1 + $0x174] sm:$0xf]
  %v122 = vld [vmem:[%s1 + $0x178] sm:$0xf]
  %v123 = vld [vmem:[%s1 + $0x17c] sm:$0xf]
  %v124 = vld [vmem:[%s1 + $0x180] sm:$0xf]
  %v125 = vld [vmem:[%s1 + $0x184] sm:$0xf]
  %v126 = vld [vmem:[%s1 + $0x188] sm:$0xf]
  %v127 = vld [vmem:[%s1 + $0x18c] sm:$0xf]
  %v128 = vld [vmem:[%s1 + $0x190] sm:$0xf]
  %v129 = vld [vmem:[%s1 + $0x194] sm:$0xf]
  %v130 = vld [vmem:[%s1 + $0x198] sm:$0xf]
  %v131 = vld [vmem:[%s1 + $0x19c] sm:$0xf]
  %v132 = vld [vmem:[%s1 + $0x1a0] sm:$0xf]
  %v133 = vld [vmem:[%s1 + $0x1a4] sm:$0xf]
  %v134 = vld [vmem:[%s1 + $0x1a8] sm:$0xf]
  %v135 = vld [vmem:[%s1 + $0x1ac] sm:$0xf]
  %v136 = vld [vmem:[%s1 + $0x1b0] sm:$0xf]
  %v137 = vld [vmem:[%s1 + $0x1b4] sm:$0xf]
  %v138 = vld [vmem:[%s1 + $0x1b8] sm:$0xf]
  %v139 = vld [vmem:[%s1 + $0x1bc] sm:$0xf]
  %v140 = vld [vmem:[%s1 + $0x1c0] sm:$0xf]
  %v141 = vld [vmem:[%s1 + $0x1c4] sm:$0xf]
  %v142 = vld [vmem:[%s1 + $0x1c8] sm:$0xf]
  %v143 = vld [vmem:[%s1 + $0x1cc] sm:$0xf]
  %v144 = vld [vmem:[%s1 + $0x1d0] sm:$0xf]
  %v145 = vld [vmem:[%s1 + $0x1d4] sm:$0xf]
  %v146 = vld [vmem:[%s1 + $0x1d8] sm:$0xf]
  %v147 = vld [vmem:[%s1 + $0x1dc] sm:$0xf]
  %v148 = vld [vmem:[%s1 + $0x1e0] sm:$0xf]
  %v149 = vld [vmem:[%s1 + $0x1e4] sm:$0xf]
  %v150 = vld [vmem:[%s1 + $0x1e8] sm:$0xf]
  %v151 = vld [vmem:[%s1 + $0x1ec] sm:$0xf]
  %v152 = vld [vmem:[%s1 + $0x1f0] sm:$0xf]
  %v153 = vld [vmem:[%s1 + $0x1f4] sm:$0xf]
  %v154 = vld [vmem:[%s1 + $0x1f8] sm:$0xf]
  %v155 = vld [vmem:[%s1 + $0x1fc] sm:$0xf]
  %v156 = vld [vmem:[%s1 + $0x200] sm:$0xf]
  %v157 = vld [vmem:[%s1 + $0x204] sm:$0xf]
  %v158 = vld [vmem:[%s1 + $0x208] sm:$0xf]
  %v159 = vld [vmem:[%s1 + $0x20c] sm:$0xf]
  %v160 = vld [vmem:[%s1 + $0x210] sm:$0xf]
  %v161 = vld [vmem:[%s1 + $0x214] sm:$0xf]
  %v162 = vld [vmem:[%s1 + $0x218] sm:$0xf]
  %v163 = vld [vmem:[%s1 + $0x21c] sm:$0xf]
  %v164 = vld [vmem:[%s1 + $0x220] sm:$0xf]
  %v165 = vld [vmem:[%s1 + $0x224] sm:$0xf]
  %v166 = vld [vmem:[%s1 + $0x228] sm:$0xf]
  %v167 = vld [vmem:[%s1 + $0x22c] sm:$0xf]
  %v168 = vld [vmem:[%s1 + $0x230] sm:$0xf]
  %v169 = vld [vmem:[%s1 + $0x234] sm:$0xf]
  %v170 = vld [vmem:[%s1 + $0x238] sm:$0xf]
  %v171 = vld [vmem:[%s1 + $0x23c] sm:$0xf]
  %v172 = vld [vmem:[%s1 + $0x240] sm:$0xf]
  %v173 = vld [vmem:[%s1 + $0x244] sm:$0xf]
  %v174 = vld [vmem:[%s1 + $0x248] sm:$0xf]
  %v175 = vld [vmem:[%s1 + $0x24c] sm:$0xf]
  %v176 = vld [vmem:[%s1 + $0x250] sm:$0xf]
  %v177 = vld [vmem:[%s1 + $0x254] sm:$0xf]
  %v178 = vld [vmem:[%s1 + $0x258] sm:$0xf]
  %v179 = vld [vmem:[%s1 + $0x25c] sm:$0xf]
  %v180 = vld [vmem:[%s1 + $0x260] sm:$0xf]
  %v181 = vld [vmem:[%s1 + $0x264] sm:$0xf]
  %v182 = vld [vmem:[%s1 + $0x268] sm:$0xf]
  %v183 = vld [vmem:[%s1 + $0x26c] sm:$0xf]
  %v184 = vld [vmem:[%s1 + $0x270] sm:$0xf]
  %v185 = vld [vmem:[%s1 + $0x274] sm:$0xf]
  %v186 = vld [vmem:[%s1 + $0x278] sm:$0xf]
  %v187 = vld [vmem:[%s1 + $0x27c] sm:$0xf]
  %v188 = vld [vmem:[%s1 + $0x280] sm:$0xf]
  %v189 = vld [vmem:[%s1 + $0x284] sm:$0xf]
  %v190 = vld [vmem:[%s1 + $0x288] sm:$0xf]
  %v191 = vld [vmem:[%s1 + $0x28c] sm:$0xf]
  %v192 = vld [vmem:[%s1 + $0x290] sm:$0xf]
  %v193 = vld [vmem:[%s1 + $0x294] sm:$0xf]
  %v194 = vld [vmem:[%s1 + $0x298] sm:$0xf]
  %v195 = vld [vmem:[%s1 + $0x29c] sm:$0xf]
  %v196 = vld [vmem:[%s1 + $0x2a0] sm:$0xf]
  %v197 = vld [vmem:[%s1 + $0x2a4] sm:$0xf]
  %v198 = vld [vmem:[%s1 + $0x2a8] sm:$0xf]
  %v199 = vld [vmem:[%s1 + $0x2ac] sm:$0xf]
  %v200 = vld [vmem:[%s1 + $0x2b0] sm:$0xf]
  %v201 = vld [vmem:[%s1 + $0x2b4] sm:$0xf]
  %v202 = vld [vmem:[%s1 + $0x2b8] sm:$0xf]
  %v203 = vld [vmem:[%s1 + $0x2bc] sm:$0xf]
  %v204 = vld [vmem:[%s1 + $0x2c0] sm:$0xf]
  %v205 = vld [vmem:[%s1 + $0x2c4] sm:$0xf]
  %v206 = vld [vmem:[%s1 + $0x2c8] sm:$0xf]
  %v207 = vld [vmem:[%s1 + $0x2cc] sm:$0xf]
  %v208 = vld [vmem:[%s1 + $0x2d0] sm:$0xf]
  %v209 = vld [vmem:[%s1 + $0x2d4] sm:$0xf]
  %v210 = vld [vmem:[%s1 + $0x2d8] sm:$0xf]
  %v211 = vld [vmem:[%s1 + $0x2dc] sm:$0xf]
  %v212 = vld [vmem:[%s1 + $0x2e0] sm:$0xf]
  %v213 = vld [vmem:[%s1 + $0x2e4] sm:$0xf]
  %v214 = vld [vmem:[%s1 + $0x2e8] sm:$0xf]
  %v215 = vld [vmem:[%s1 + $0x2ec] sm:$0xf]
  %v216 = vld [vmem:[%s1 + $0x2f0] sm:$0xf]
  %v217 = vld [vmem:[%s1 + $0x2f4] sm:$0xf]
  %v218 = vld [vmem:[%s1 + $0x2f8] sm:$0xf]
  %v219 = vld [vmem:[%s1 + $0x2fc] sm:$0xf]
  %s220 = sld [smem:[#allocation2]]
  %v221 = vstv %s220
  %v234 = vunpack.c.l.b16 %v16
  %v235 = vunpack.c.h.b16 %v16
  %v236 = vunpack.c.l.b16 %v17
  %v237 = vunpack.c.h.b16 %v17
  %v238 = vunpack.c.l.b16 %v18
  %v239 = vunpack.c.h.b16 %v18
  %v240 = vunpack.c.l.b16 %v19
  %v241 = vunpack.c.h.b16 %v19
  %v242 = vunpack.c.l.b16 %v20
  %v243 = vunpack.c.h.b16 %v20
  %v244 = vunpack.c.l.b16 %v21
  %v245 = vunpack.c.h.b16 %v21
  %v246 = vunpack.c.l.b16 %v22
  %v247 = vunpack.c.h.b16 %v22
  %v248 = vunpack.c.l.b16 %v23
  %v249 = vunpack.c.h.b16 %v23
  %v250 = vunpack.c.l.b16 %v24
  %v251 = vunpack.c.h.b16 %v24
  %v252 = vunpack.c.l.b16 %v25
  %v253 = vunpack.c.h.b16 %v25
  %v254 = vunpack.c.l.b16 %v26
  %v255 = vunpack.c.h.b16 %v26
  %v256 = vunpack.c.l.b16 %v27
  %v257 = vunpack.c.h.b16 %v27
  %v258 = vpack.c.b16 %v246, %v234
  %v259 = vpack.c.b16 %v247, %v235
  %v260 = vpack.c.b16 %v248, %v236
  %v261 = vpack.c.b16 %v249, %v237
  %v262 = vpack.c.b16 %v250, %v238
  %v263 = vpack.c.b16 %v251, %v239
  %v264 = vpack.c.b16 %v252, %v240
  %v265 = vpack.c.b16 %v253, %v241
  %v266 = vpack.c.b16 %v254, %v242
  %v267 = vpack.c.b16 %v255, %v243
  %v268 = vpack.c.b16 %v256, %v244
  %v269 = vpack.c.b16 %v257, %v245
  %v474 = vunpack.c.l.b16 %v28
  %v475 = vunpack.c.l.b16 %v29
  %v476 = vunpack.c.l.b16 %v30
  %v477 = vunpack.c.l.b16 %v31
  %v478 = vunpack.c.l.b16 %v32
  %v479 = vunpack.c.l.b16 %v33
  %v480 = vunpack.c.l.b16 %v34
  %v481 = vunpack.c.l.b16 %v35
  %v482 = vunpack.c.l.b16 %v36
  %v483 = vunpack.c.l.b16 %v37
  %v484 = vunpack.c.l.b16 %v38
  %v485 = vunpack.c.l.b16 %v39
  %v486 = vunpack.c.l.b16 %v40
  %v487 = vunpack.c.l.b16 %v41
  %v488 = vunpack.c.l.b16 %v42
  %v489 = vunpack.c.l.b16 %v43
  %v490 = vunpack.c.l.b16 %v44
  %v491 = vunpack.c.l.b16 %v45
  %v492 = vunpack.c.l.b16 %v46
  %v493 = vunpack.c.l.b16 %v47
  %v494 = vunpack.c.l.b16 %v48
  %v495 = vunpack.c.l.b16 %v49
  %v496 = vunpack.c.l.b16 %v50
  %v497 = vunpack.c.l.b16 %v51
  %v498 = vunpack.c.l.b16 %v52
  %v499 = vunpack.c.l.b16 %v53
  %v500 = vunpack.c.l.b16 %v54
  %v501 = vunpack.c.l.b16 %v55
  %v502 = vunpack.c.l.b16 %v56
  %v503 = vunpack.c.l.b16 %v57
  %v504 = vunpack.c.l.b16 %v58
  %v505 = vunpack.c.l.b16 %v59
  %v506 = vunpack.c.l.b16 %v60
  %v507 = vunpack.c.l.b16 %v61
  %v508 = vunpack.c.l.b16 %v62
  %v509 = vunpack.c.l.b16 %v63
  %v510 = vunpack.c.l.b16 %v64
  %v511 = vunpack.c.l.b16 %v65
  %v512 = vunpack.c.l.b16 %v66
  %v513 = vunpack.c.l.b16 %v67
  %v514 = vunpack.c.l.b16 %v68
  %v515 = vunpack.c.l.b16 %v69
  %v516 = vunpack.c.l.b16 %v70
  %v517 = vunpack.c.l.b16 %v71
  %v518 = vunpack.c.l.b16 %v72
  %v519 = vunpack.c.l.b16 %v73
  %v520 = vunpack.c.l.b16 %v74
  %v521 = vunpack.c.l.b16 %v75
  %v522 = vunpack.c.l.b16 %v76
  %v523 = vunpack.c.l.b16 %v77
  %v524 = vunpack.c.l.b16 %v78
  %v525 = vunpack.c.l.b16 %v79
  %v526 = vunpack.c.l.b16 %v80
  %v527 = vunpack.c.l.b16 %v81
  %v528 = vunpack.c.l.b16 %v82
  %v529 = vunpack.c.l.b16 %v83
  %v530 = vunpack.c.l.b16 %v84
  %v531 = vunpack.c.l.b16 %v85
  %v532 = vunpack.c.l.b16 %v86
  %v533 = vunpack.c.l.b16 %v87
  %v534 = vunpack.c.l.b16 %v88
  %v535 = vunpack.c.l.b16 %v89
  %v536 = vunpack.c.l.b16 %v90
  %v537 = vunpack.c.l.b16 %v91
  %v538 = vunpack.c.l.b16 %v92
  %v539 = vunpack.c.l.b16 %v93
  %v540 = vunpack.c.l.b16 %v94
  %v541 = vunpack.c.l.b16 %v95
  %v542 = vunpack.c.l.b16 %v96
  %v543 = vunpack.c.l.b16 %v97
  %v544 = vunpack.c.l.b16 %v98
  %v545 = vunpack.c.l.b16 %v99
  %v546 = vunpack.c.l.b16 %v100
  %v547 = vunpack.c.l.b16 %v101
  %v548 = vunpack.c.l.b16 %v102
  %v549 = vunpack.c.l.b16 %v103
  %v550 = vunpack.c.l.b16 %v104
  %v551 = vunpack.c.l.b16 %v105
  %v552 = vunpack.c.l.b16 %v106
  %v553 = vunpack.c.l.b16 %v107
  %v554 = vunpack.c.l.b16 %v108
  %v555 = vunpack.c.l.b16 %v109
  %v556 = vunpack.c.l.b16 %v110
  %v557 = vunpack.c.l.b16 %v111
  %v558 = vunpack.c.l.b16 %v112
  %v559 = vunpack.c.l.b16 %v113
  %v560 = vunpack.c.l.b16 %v114
  %v561 = vunpack.c.l.b16 %v115
  %v562 = vunpack.c.l.b16 %v116
  %v563 = vunpack.c.l.b16 %v117
  %v564 = vunpack.c.l.b16 %v118
  %v565 = vunpack.c.l.b16 %v119
  %v566 = vunpack.c.l.b16 %v120
  %v567 = vunpack.c.l.b16 %v121
  %v568 = vunpack.c.l.b16 %v122
  %v569 = vunpack.c.l.b16 %v123
  %v570 = vunpack.c.l.b16 %v124
  %v571 = vunpack.c.l.b16 %v125
  %v572 = vunpack.c.l.b16 %v126
  %v573 = vunpack.c.l.b16 %v127
  %v574 = vunpack.c.l.b16 %v128
  %v575 = vunpack.c.l.b16 %v129
  %v576 = vunpack.c.l.b16 %v130
  %v577 = vunpack.c.l.b16 %v131
  %v578 = vunpack.c.l.b16 %v132
  %v579 = vunpack.c.l.b16 %v133
  %v580 = vunpack.c.l.b16 %v134
  %v581 = vunpack.c.l.b16 %v135
  %v582 = vunpack.c.l.b16 %v136
  %v583 = vunpack.c.l.b16 %v137
  %v584 = vunpack.c.l.b16 %v138
  %v585 = vunpack.c.l.b16 %v139
  %v586 = vunpack.c.l.b16 %v140
  %v587 = vunpack.c.l.b16 %v141
  %v588 = vunpack.c.l.b16 %v142
  %v589 = vunpack.c.l.b16 %v143
  %v590 = vunpack.c.l.b16 %v144
  %v591 = vunpack.c.l.b16 %v145
  %v592 = vunpack.c.l.b16 %v146
  %v593 = vunpack.c.l.b16 %v147
  %v594 = vunpack.c.l.b16 %v148
  %v595 = vunpack.c.l.b16 %v149
  %v596 = vunpack.c.l.b16 %v150
  %v597 = vunpack.c.l.b16 %v151
  %v598 = vunpack.c.l.b16 %v152
  %v599 = vunpack.c.l.b16 %v153
  %v600 = vunpack.c.l.b16 %v154
  %v601 = vunpack.c.l.b16 %v155
  %v602 = vunpack.c.l.b16 %v156
  %v603 = vunpack.c.l.b16 %v157
  %v604 = vunpack.c.l.b16 %v158
  %v605 = vunpack.c.l.b16 %v159
  %v606 = vunpack.c.l.b16 %v160
  %v607 = vunpack.c.l.b16 %v161
  %v608 = vunpack.c.l.b16 %v162
  %v609 = vunpack.c.l.b16 %v163
  %v610 = vunpack.c.l.b16 %v164
  %v611 = vunpack.c.l.b16 %v165
  %v612 = vunpack.c.l.b16 %v166
  %v613 = vunpack.c.l.b16 %v167
  %v614 = vunpack.c.l.b16 %v168
  %v615 = vunpack.c.l.b16 %v169
  %v616 = vunpack.c.l.b16 %v170
  %v617 = vunpack.c.l.b16 %v171
  %v618 = vunpack.c.l.b16 %v172
  %v619 = vunpack.c.l.b16 %v173
  %v620 = vunpack.c.l.b16 %v174
  %v621 = vunpack.c.l.b16 %v175
  %v622 = vunpack.c.l.b16 %v176
  %v623 = vunpack.c.l.b16 %v177
  %v624 = vunpack.c.l.b16 %v178
  %v625 = vunpack.c.l.b16 %v179
  %v626 = vunpack.c.l.b16 %v180
  %v627 = vunpack.c.l.b16 %v181
  %v628 = vunpack.c.l.b16 %v182
  %v629 = vunpack.c.l.b16 %v183
  %v630 = vunpack.c.l.b16 %v184
  %v631 = vunpack.c.l.b16 %v185
  %v632 = vunpack.c.l.b16 %v186
  %v633 = vunpack.c.l.b16 %v187
  %v634 = vunpack.c.l.b16 %v188
  %v635 = vunpack.c.l.b16 %v189
  %v636 = vunpack.c.l.b16 %v190
  %v637 = vunpack.c.l.b16 %v191
  %v638 = vunpack.c.l.b16 %v192
  %v639 = vunpack.c.l.b16 %v193
  %v640 = vunpack.c.l.b16 %v194
  %v641 = vunpack.c.l.b16 %v195
  %v642 = vunpack.c.l.b16 %v196
  %v643 = vunpack.c.l.b16 %v197
  %v644 = vunpack.c.l.b16 %v198
  %v645 = vunpack.c.l.b16 %v199
  %v646 = vunpack.c.l.b16 %v200
  %v647 = vunpack.c.l.b16 %v201
  %v648 = vunpack.c.l.b16 %v202
  %v649 = vunpack.c.l.b16 %v203
  %v650 = vunpack.c.l.b16 %v204
  %v651 = vunpack.c.l.b16 %v205
  %v652 = vunpack.c.l.b16 %v206
  %v653 = vunpack.c.l.b16 %v207
  %v654 = vunpack.c.l.b16 %v208
  %v655 = vunpack.c.l.b16 %v209
  %v656 = vunpack.c.l.b16 %v210
  %v657 = vunpack.c.l.b16 %v211
  %v658 = vunpack.c.l.b16 %v212
  %v659 = vunpack.c.l.b16 %v213
  %v660 = vunpack.c.l.b16 %v214
  %v661 = vunpack.c.l.b16 %v215
  %v662 = vunpack.c.l.b16 %v216
  %v663 = vunpack.c.l.b16 %v217
  %v664 = vunpack.c.l.b16 %v218
  %v665 = vunpack.c.l.b16 %v219
  %v666 = vpack.c.b16 %v475, %v474
  %v667 = vpack.c.b16 %v477, %v476
  %v668 = vpack.c.b16 %v479, %v478
  %v669 = vpack.c.b16 %v481, %v480
  %v670 = vpack.c.b16 %v483, %v482
  %v671 = vpack.c.b16 %v485, %v484
  %v672 = vpack.c.b16 %v487, %v486
  %v673 = vpack.c.b16 %v489, %v488
  %v674 = vpack.c.b16 %v491, %v490
  %v675 = vpack.c.b16 %v493, %v492
  %v676 = vpack.c.b16 %v495, %v494
  %v677 = vpack.c.b16 %v497, %v496
  %v678 = vpack.c.b16 %v499, %v498
  %v679 = vpack.c.b16 %v501, %v500
  %v680 = vpack.c.b16 %v503, %v502
  %v681 = vpack.c.b16 %v505, %v504
  %v682 = vpack.c.b16 %v507, %v506
  %v683 = vpack.c.b16 %v509, %v508
  %v684 = vpack.c.b16 %v511, %v510
  %v685 = vpack.c.b16 %v513, %v512
  %v686 = vpack.c.b16 %v515, %v514
  %v687 = vpack.c.b16 %v517, %v516
  %v688 = vpack.c.b16 %v519, %v518
  %v689 = vpack.c.b16 %v521, %v520
  %v690 = vpack.c.b16 %v523, %v522
  %v691 = vpack.c.b16 %v525, %v524
  %v692 = vpack.c.b16 %v527, %v526
  %v693 = vpack.c.b16 %v529, %v528
  %v694 = vpack.c.b16 %v531, %v530
  %v695 = vpack.c.b16 %v533, %v532
  %v696 = vpack.c.b16 %v535, %v534
  %v697 = vpack.c.b16 %v537, %v536
  %v698 = vpack.c.b16 %v539, %v538
  %v699 = vpack.c.b16 %v541, %v540
  %v700 = vpack.c.b16 %v543, %v542
  %v701 = vpack.c.b16 %v545, %v544
  %v702 = vpack.c.b16 %v547, %v546
  %v703 = vpack.c.b16 %v549, %v548
  %v704 = vpack.c.b16 %v551, %v550
  %v705 = vpack.c.b16 %v553, %v552
  %v706 = vpack.c.b16 %v555, %v554
  %v707 = vpack.c.b16 %v557, %v556
  %v708 = vpack.c.b16 %v559, %v558
  %v709 = vpack.c.b16 %v561, %v560
  %v710 = vpack.c.b16 %v563, %v562
  %v711 = vpack.c.b16 %v565, %v564
  %v712 = vpack.c.b16 %v567, %v566
  %v713 = vpack.c.b16 %v569, %v568
  %v714 = vpack.c.b16 %v571, %v570
  %v715 = vpack.c.b16 %v573, %v572
  %v716 = vpack.c.b16 %v575, %v574
  %v717 = vpack.c.b16 %v577, %v576
  %v718 = vpack.c.b16 %v579, %v578
  %v719 = vpack.c.b16 %v581, %v580
  %v720 = vpack.c.b16 %v583, %v582
  %v721 = vpack.c.b16 %v585, %v584
  %v722 = vpack.c.b16 %v587, %v586
  %v723 = vpack.c.b16 %v589, %v588
  %v724 = vpack.c.b16 %v591, %v590
  %v725 = vpack.c.b16 %v593, %v592
  %v726 = vpack.c.b16 %v595, %v594
  %v727 = vpack.c.b16 %v597, %v596
  %v728 = vpack.c.b16 %v599, %v598
  %v729 = vpack.c.b16 %v601, %v600
  %v730 = vpack.c.b16 %v603, %v602
  %v731 = vpack.c.b16 %v605, %v604
  %v732 = vpack.c.b16 %v607, %v606
  %v733 = vpack.c.b16 %v609, %v608
  %v734 = vpack.c.b16 %v611, %v610
  %v735 = vpack.c.b16 %v613, %v612
  %v736 = vpack.c.b16 %v615, %v614
  %v737 = vpack.c.b16 %v617, %v616
  %v738 = vpack.c.b16 %v619, %v618
  %v739 = vpack.c.b16 %v621, %v620
  %v740 = vpack.c.b16 %v623, %v622
  %v741 = vpack.c.b16 %v625, %v624
  %v742 = vpack.c.b16 %v627, %v626
  %v743 = vpack.c.b16 %v629, %v628
  %v744 = vpack.c.b16 %v631, %v630
  %v745 = vpack.c.b16 %v633, %v632
  %v746 = vpack.c.b16 %v635, %v634
  %v747 = vpack.c.b16 %v637, %v636
  %v748 = vpack.c.b16 %v639, %v638
  %v749 = vpack.c.b16 %v641, %v640
  %v750 = vpack.c.b16 %v643, %v642
  %v751 = vpack.c.b16 %v645, %v644
  %v752 = vpack.c.b16 %v647, %v646
  %v753 = vpack.c.b16 %v649, %v648
  %v754 = vpack.c.b16 %v651, %v650
  %v755 = vpack.c.b16 %v653, %v652
  %v756 = vpack.c.b16 %v655, %v654
  %v757 = vpack.c.b16 %v657, %v656
  %v758 = vpack.c.b16 %v659, %v658
  %v759 = vpack.c.b16 %v661, %v660
  %v760 = vpack.c.b16 %v663, %v662
  %v761 = vpack.c.b16 %v665, %v664
  %858 = vmatprep.subr.bf16.mxu0 0
  %859 = vmatpush1.bf16.msra.mxu0 %v666
  %860 = vmatprep.subr.bf16.mxu0 0
  %861 = vmatpush1.bf16.msra.mxu0 %v667
  %862 = vmatprep.subr.bf16.mxu0 0
  %863 = vmatpush1.bf16.msra.mxu0 %v668
  %864 = vmatprep.subr.bf16.mxu0 0
  %865 = vmatpush1.bf16.msra.mxu0 %v669
  %866 = vmatprep.subr.bf16.mxu0 0
  %867 = vmatpush1.bf16.msra.mxu0 %v670
  %868 = vmatprep.subr.bf16.mxu0 0
  %869 = vmatpush1.bf16.msra.mxu0 %v671
  %870 = vmatprep.subr.bf16.mxu0 0
  %871 = vmatpush1.bf16.msra.mxu0 %v672
  %872 = vmatprep.subr.bf16.mxu0 0
  %873 = vmatpush1.bf16.msra.mxu0 %v673
  %874 = vmatprep.subr.bf16.mxu0 0
  %875 = vmatpush1.bf16.msra.mxu0 %v674
  %876 = vmatprep.subr.bf16.mxu0 0
  %877 = vmatpush1.bf16.msra.mxu0 %v675
  %878 = vmatprep.subr.bf16.mxu0 0
  %879 = vmatpush1.bf16.msra.mxu0 %v676
  %880 = vmatprep.subr.bf16.mxu0 0
  %881 = vmatpush1.bf16.msra.mxu0 %v677
  %882 = vmatprep.subr.bf16.mxu0 0
  %883 = vmatpush1.bf16.msra.mxu0 %v678
  %884 = vmatprep.subr.bf16.mxu0 0
  %885 = vmatpush1.bf16.msra.mxu0 %v679
  %886 = vmatprep.subr.bf16.mxu0 0
  %887 = vmatpush1.bf16.msra.mxu0 %v680
  %888 = vmatprep.subr.bf16.mxu0 0
  %889 = vmatpush1.bf16.msra.mxu0 %v681
  %890 = vmatprep.mubr.bf16.mxu0 %v259
  %891 = vmatmul.mubr.bf16.gmra.mrb[0].mxu0 %v258
  %v892 = vpop.f32.mrb[0].mxu0
  %v893 = vadd.f32 %v221, %v892
  %v894 = vpop.f32.mrb[0].mxu0
  %v895 = vpop.f32.mrb[0].mxu0
  %v896 = vadd.f32 %v221, %v895
  %v897 = vpop.f32.mrb[0].mxu0
  %898 = vdwg.mxu0
  %899 = vmatprep.subr.bf16.mxu0 0
  %900 = vmatpush1.bf16.msra.mxu0 %v682
  %901 = vmatprep.subr.bf16.mxu0 0
  %902 = vmatpush1.bf16.msra.mxu0 %v683
  %903 = vmatprep.subr.bf16.mxu0 0
  %904 = vmatpush1.bf16.msra.mxu0 %v684
  %905 = vmatprep.subr.bf16.mxu0 0
  %906 = vmatpush1.bf16.msra.mxu0 %v685
  %907 = vmatprep.subr.bf16.mxu0 0
  %908 = vmatpush1.bf16.msra.mxu0 %v686
  %909 = vmatprep.subr.bf16.mxu0 0
  %910 = vmatpush1.bf16.msra.mxu0 %v687
  %911 = vmatprep.subr.bf16.mxu0 0
  %912 = vmatpush1.bf16.msra.mxu0 %v688
  %913 = vmatprep.subr.bf16.mxu0 0
  %914 = vmatpush1.bf16.msra.mxu0 %v689
  %915 = vmatprep.subr.bf16.mxu0 0
  %916 = vmatpush1.bf16.msra.mxu0 %v690
  %917 = vmatprep.subr.bf16.mxu0 0
  %918 = vmatpush1.bf16.msra.mxu0 %v691
  %919 = vmatprep.subr.bf16.mxu0 0
  %920 = vmatpush1.bf16.msra.mxu0 %v692
  %921 = vmatprep.subr.bf16.mxu0 0
  %922 = vmatpush1.bf16.msra.mxu0 %v693
  %923 = vmatprep.subr.bf16.mxu0 0
  %924 = vmatpush1.bf16.msra.mxu0 %v694
  %925 = vmatprep.subr.bf16.mxu0 0
  %926 = vmatpush1.bf16.msra.mxu0 %v695
  %927 = vmatprep.subr.bf16.mxu0 0
  %928 = vmatpush1.bf16.msra.mxu0 %v696
  %929 = vmatprep.subr.bf16.mxu0 0
  %930 = vmatpush1.bf16.msra.mxu0 %v697
  %931 = vmatprep.mubr.bf16.mxu0 %v261
  %932 = vmatmul.mubr.bf16.gmra.mrb[0].mxu0 %v260
  %v933 = vpop.f32.mrb[0].mxu0
  %v934 = vadd.f32 %v893, %v933
  %v935 = vpop.f32.mrb[0].mxu0
  %v936 = vpop.f32.mrb[0].mxu0
  %v937 = vadd.f32 %v896, %v936
  %v938 = vpop.f32.mrb[0].mxu0
  %939 = vdwg.mxu0
  %940 = vmatprep.subr.bf16.mxu0 0
  %941 = vmatpush1.bf16.msra.mxu0 %v698
  %942 = vmatprep.subr.bf16.mxu0 0
  %943 = vmatpush1.bf16.msra.mxu0 %v699
  %944 = vmatprep.subr.bf16.mxu0 0
  %945 = vmatpush1.bf16.msra.mxu0 %v700
  %946 = vmatprep.subr.bf16.mxu0 0
  %947 = vmatpush1.bf16.msra.mxu0 %v701
  %948 = vmatprep.subr.bf16.mxu0 0
  %949 = vmatpush1.bf16.msra.mxu0 %v702
  %950 = vmatprep.subr.bf16.mxu0 0
  %951 = vmatpush1.bf16.msra.mxu0 %v703
  %952 = vmatprep.subr.bf16.mxu0 0
  %953 = vmatpush1.bf16.msra.mxu0 %v704
  %954 = vmatprep.subr.bf16.mxu0 0
  %955 = vmatpush1.bf16.msra.mxu0 %v705
  %956 = vmatprep.subr.bf16.mxu0 0
  %957 = vmatpush1.bf16.msra.mxu0 %v706
  %958 = vmatprep.subr.bf16.mxu0 0
  %959 = vmatpush1.bf16.msra.mxu0 %v707
  %960 = vmatprep.subr.bf16.mxu0 0
  %961 = vmatpush1.bf16.msra.mxu0 %v708
  %962 = vmatprep.subr.bf16.mxu0 0
  %963 = vmatpush1.bf16.msra.mxu0 %v709
  %964 = vmatprep.subr.bf16.mxu0 0
  %965 = vmatpush1.bf16.msra.mxu0 %v710
  %966 = vmatprep.subr.bf16.mxu0 0
  %967 = vmatpush1.bf16.msra.mxu0 %v711
  %968 = vmatprep.subr.bf16.mxu0 0
  %969 = vmatpush1.bf16.msra.mxu0 %v712
  %970 = vmatprep.subr.bf16.mxu0 0
  %971 = vmatpush1.bf16.msra.mxu0 %v713
  %972 = vmatprep.mubr.bf16.mxu0 %v263
  %973 = vmatmul.mubr.bf16.gmra.mrb[0].mxu0 %v262
  %v974 = vpop.f32.mrb[0].mxu0
  %v975 = vadd.f32 %v934, %v974
  %v976 = vpop.f32.mrb[0].mxu0
  %v977 = vpop.f32.mrb[0].mxu0
  %v978 = vadd.f32 %v937, %v977
  %v979 = vpop.f32.mrb[0].mxu0
  %980 = vdwg.mxu0
  %981 = vmatprep.subr.bf16.mxu0 0
  %982 = vmatpush1.bf16.msra.mxu0 %v714
  %983 = vmatprep.subr.bf16.mxu0 0
  %984 = vmatpush1.bf16.msra.mxu0 %v715
  %985 = vmatprep.subr.bf16.mxu0 0
  %986 = vmatpush1.bf16.msra.mxu0 %v716
  %987 = vmatprep.subr.bf16.mxu0 0
  %988 = vmatpush1.bf16.msra.mxu0 %v717
  %989 = vmatprep.subr.bf16.mxu0 0
  %990 = vmatpush1.bf16.msra.mxu0 %v718
  %991 = vmatprep.subr.bf16.mxu0 0
  %992 = vmatpush1.bf16.msra.mxu0 %v719
  %993 = vmatprep.subr.bf16.mxu0 0
  %994 = vmatpush1.bf16.msra.mxu0 %v720
  %995 = vmatprep.subr.bf16.mxu0 0
  %996 = vmatpush1.bf16.msra.mxu0 %v721
  %997 = vmatprep.subr.bf16.mxu0 0
  %998 = vmatpush1.bf16.msra.mxu0 %v722
  %999 = vmatprep.subr.bf16.mxu0 0
  %1000 = vmatpush1.bf16.msra.mxu0 %v723
  %1001 = vmatprep.subr.bf16.mxu0 0
  %1002 = vmatpush1.bf16.msra.mxu0 %v724
  %1003 = vmatprep.subr.bf16.mxu0 0
  %1004 = vmatpush1.bf16.msra.mxu0 %v725
  %1005 = vmatprep.subr.bf16.mxu0 0
  %1006 = vmatpush1.bf16.msra.mxu0 %v726
  %1007 = vmatprep.subr.bf16.mxu0 0
  %1008 = vmatpush1.bf16.msra.mxu0 %v727
  %1009 = vmatprep.subr.bf16.mxu0 0
  %1010 = vmatpush1.bf16.msra.mxu0 %v728
  %1011 = vmatprep.subr.bf16.mxu0 0
  %1012 = vmatpush1.bf16.msra.mxu0 %v729
  %1013 = vmatprep.mubr.bf16.mxu0 %v265
  %1014 = vmatmul.mubr.bf16.gmra.mrb[0].mxu0 %v264
  %v1015 = vpop.f32.mrb[0].mxu0
  %v1016 = vadd.f32 %v975, %v1015
  %v1017 = vpop.f32.mrb[0].mxu0
  %v1018 = vpop.f32.mrb[0].mxu0
  %v1019 = vadd.f32 %v978, %v1018
  %v1020 = vpop.f32.mrb[0].mxu0
  %1021 = vdwg.mxu0
  %1022 = vmatprep.subr.bf16.mxu0 0
  %1023 = vmatpush1.bf16.msra.mxu0 %v730
  %1024 = vmatprep.subr.bf16.mxu0 0
  %1025 = vmatpush1.bf16.msra.mxu0 %v731
  %1026 = vmatprep.subr.bf16.mxu0 0
  %1027 = vmatpush1.bf16.msra.mxu0 %v732
  %1028 = vmatprep.subr.bf16.mxu0 0
  %1029 = vmatpush1.bf16.msra.mxu0 %v733
  %1030 = vmatprep.subr.bf16.mxu0 0
  %1031 = vmatpush1.bf16.msra.mxu0 %v734
  %1032 = vmatprep.subr.bf16.mxu0 0
  %1033 = vmatpush1.bf16.msra.mxu0 %v735
  %1034 = vmatprep.subr.bf16.mxu0 0
  %1035 = vmatpush1.bf16.msra.mxu0 %v736
  %1036 = vmatprep.subr.bf16.mxu0 0
  %1037 = vmatpush1.bf16.msra.mxu0 %v737
  %1038 = vmatprep.subr.bf16.mxu0 0
  %1039 = vmatpush1.bf16.msra.mxu0 %v738
  %1040 = vmatprep.subr.bf16.mxu0 0
  %1041 = vmatpush1.bf16.msra.mxu0 %v739
  %1042 = vmatprep.subr.bf16.mxu0 0
  %1043 = vmatpush1.bf16.msra.mxu0 %v740
  %1044 = vmatprep.subr.bf16.mxu0 0
  %1045 = vmatpush1.bf16.msra.mxu0 %v741
  %1046 = vmatprep.subr.bf16.mxu0 0
  %1047 = vmatpush1.bf16.msra.mxu0 %v742
  %1048 = vmatprep.subr.bf16.mxu0 0
  %1049 = vmatpush1.bf16.msra.mxu0 %v743
  %1050 = vmatprep.subr.bf16.mxu0 0
  %1051 = vmatpush1.bf16.msra.mxu0 %v744
  %1052 = vmatprep.subr.bf16.mxu0 0
  %1053 = vmatpush1.bf16.msra.mxu0 %v745
  %1054 = vmatprep.mubr.bf16.mxu0 %v267
  %1055 = vmatmul.mubr.bf16.gmra.mrb[0].mxu0 %v266
  %v1056 = vpop.f32.mrb[0].mxu0
  %v1057 = vadd.f32 %v1016, %v1056
  %v1058 = vpop.f32.mrb[0].mxu0
  %v1059 = vpop.f32.mrb[0].mxu0
  %v1060 = vadd.f32 %v1019, %v1059
  %v1061 = vpop.f32.mrb[0].mxu0
  %1062 = vdwg.mxu0
  %1063 = vmatprep.subr.bf16.mxu0 0
  %1064 = vmatpush1.bf16.msra.mxu0 %v746
  %1065 = vmatprep.subr.bf16.mxu0 0
  %1066 = vmatpush1.bf16.msra.mxu0 %v747
  %1067 = vmatprep.subr.bf16.mxu0 0
  %1068 = vmatpush1.bf16.msra.mxu0 %v748
  %1069 = vmatprep.subr.bf16.mxu0 0
  %1070 = vmatpush1.bf16.msra.mxu0 %v749
  %1071 = vmatprep.subr.bf16.mxu0 0
  %1072 = vmatpush1.bf16.msra.mxu0 %v750
  %1073 = vmatprep.subr.bf16.mxu0 0
  %1074 = vmatpush1.bf16.msra.mxu0 %v751
  %1075 = vmatprep.subr.bf16.mxu0 0
  %1076 = vmatpush1.bf16.msra.mxu0 %v752
  %1077 = vmatprep.subr.bf16.mxu0 0
  %1078 = vmatpush1.bf16.msra.mxu0 %v753
  %1079 = vmatprep.subr.bf16.mxu0 0
  %1080 = vmatpush1.bf16.msra.mxu0 %v754
  %1081 = vmatprep.subr.bf16.mxu0 0
  %1082 = vmatpush1.bf16.msra.mxu0 %v755
  %1083 = vmatprep.subr.bf16.mxu0 0
  %1084 = vmatpush1.bf16.msra.mxu0 %v756
  %1085 = vmatprep.subr.bf16.mxu0 0
  %1086 = vmatpush1.bf16.msra.mxu0 %v757
  %1087 = vmatprep.subr.bf16.mxu0 0
  %1088 = vmatpush1.bf16.msra.mxu0 %v758
  %1089 = vmatprep.subr.bf16.mxu0 0
  %1090 = vmatpush1.bf16.msra.mxu0 %v759
  %1091 = vmatprep.subr.bf16.mxu0 0
  %1092 = vmatpush1.bf16.msra.mxu0 %v760
  %1093 = vmatprep.subr.bf16.mxu0 0
  %1094 = vmatpush1.bf16.msra.mxu0 %v761
  %1095 = vmatprep.mubr.bf16.mxu0 %v269
  %1096 = vmatmul.mubr.bf16.gmra.mrb[0].mxu0 %v268
  %v1097 = vpop.f32.mrb[0].mxu0
  %v1098 = vadd.f32 %v1057, %v1097
  %v1099 = vpop.f32.mrb[0].mxu0
  %v1100 = vpop.f32.mrb[0].mxu0
  %v1101 = vadd.f32 %v1060, %v1100
  %v1102 = vpop.f32.mrb[0].mxu0
  %1103 = vdwg.mxu0
  %v1104 = vxor.u32 %v1098, 2147483648
  %v1105 = vxor.u32 %v1101, 2147483648
  %v1106 = vmul.f32 %v1104, 1.442695
  %v1107 = vpow.pop %v1106
  %v1108 = vmul.f32 %v1105, 1.442695
  %v1109 = vpow.pop %v1108
  %v1110 = vadd.f32 %v1107, 1.0
  %v1111 = vadd.f32 %v1109, 1.0
  %v1112 = vrcp.pop %v1110
  %v1113 = vmul.f32 1.0, %v1112
  %v1114 = vrcp.pop %v1111
  %v1115 = vmul.f32 1.0, %v1114
  %vm1116 = vcmask 7168
  %1117 = vst.msk [vmem:[%s3] sm:$0xff] %vm1116, %v1113
  %1118 = vst.msk [vmem:[%s3 + $0x8] sm:$0xff] %vm1116, %v1115
  // Predicated region
  $region14: #{fluency_forward_pallas.1} parent=0 // pred_check
    _
  $region15: #{fluency_forward_pallas.1} parent=0 // pred_check_branch
    %1120 = sbr.rel (0) target = $region17
  $region16: #{fluency_forward_pallas.1} parent=0 // pred_region
    _
  $region17: #{fluency_forward_pallas.1} parent=0 // pred_fallthru
    _
  // Predicated region
  $region18: #{fluency_forward_pallas.1} parent=0 // pred_check
    _
  $region19: #{fluency_forward_pallas.1} parent=0 // pred_check_branch
    %1122 = sbr.rel (0) target = $region21
  $region20: #{fluency_forward_pallas.1} parent=0 // pred_region
    _
  $region21: #{fluency_forward_pallas.1} parent=0 // pred_fallthru
    _

</llo_original>
